<compile_context>
chip_gen: v7x
topology: tpu7x:2x2x1
jax: 0.10.0
libtpu: 0.0.40
codegen_flags: <defaults>
</compile_context>

<pallas_src>
import jax
import jax.numpy as jnp
from jax.experimental import pallas as pl
from jax.experimental.pallas import tpu as pltpu


# ---------------------------------------------------------------------------
# Kernels
# ---------------------------------------------------------------------------

def _mixup_image_kernel(lam_ref, x_ref, xprev_ref, xo_ref):
    """Blend one (TB, N) tile of the flattened batch with its batch-roll.

    lam_ref   : SMEM (1,) f32     mixup lambda (1.0 == "not applied")
    x_ref     : VMEM (TB, N)      rows [t*TB, t*TB+TB) of the flattened batch
    xprev_ref : VMEM (1, 1, N)    row (t*TB - 1) mod B  (boundary row only)
    xo_ref    : VMEM (TB, N)      mixed output tile
    """
    lam_f32 = lam_ref[0]
    # Blend in the input dtype (scalar cast once per grid step); exact for f32.
    lam = lam_f32.astype(x_ref.dtype)
    one_minus = (1.0 - lam_f32).astype(x_ref.dtype)

    cur = x_ref[...]          # (TB, N)
    prev = xprev_ref[0]       # (1, N)

    # rolled[i] = x[(global_row_i - 1) mod B]:
    #   row 0        <- boundary row (previous tile's last row, with wrap)
    #   rows 1..TB-1 <- rows 0..TB-2 of the current tile (already in VMEM)
    if cur.shape[0] == 1:
        rolled = prev
    else:
        rolled = jnp.concatenate([prev, cur[:-1, :]], axis=0)

    xo_ref[...] = lam * cur + one_minus * rolled


def _mixup_label_kernel(lam_ref, t_ref, to_ref):
    """One-hot encode targets and mix with their batch-roll (single block)."""
    lam_f32 = lam_ref[0]
    b, nc = to_ref.shape

    t = t_ref[...]            # (B, 1) int32
    if b == 1:
        t_rolled = t
    else:
        t_rolled = jnp.concatenate([t[-1:, :], t[:-1, :]], axis=0)

    cls = jax.lax.broadcasted_iota(jnp.int32, (b, nc), 1)
    oh = (t == cls).astype(to_ref.dtype)
    oh_r = (t_rolled == cls).astype(to_ref.dtype)

    lam = lam_f32.astype(to_ref.dtype)
    one_minus = (1.0 - lam_f32).astype(to_ref.dtype)
    to_ref[...] = lam * oh + one_minus * oh_r


# ---------------------------------------------------------------------------
# Wrapper
# ---------------------------------------------------------------------------

def _sample_lambda(key, p, alpha):
    """Host-side randomness mirroring torch.rand(1) / torch._sample_dirichlet."""
    k_p, k_beta = jax.random.split(key)
    apply_mix = jax.random.uniform(k_p, (), jnp.float32) < p   # rand >= p -> identity
    lam_beta = jax.random.beta(k_beta, alpha, alpha).astype(jnp.float32)
    # lam == 1.0 reproduces the "no transform" branch exactly
    # (batch unchanged, target still one-hot encoded).
    return jnp.where(apply_mix, lam_beta, jnp.float32(1.0))


def _choose_tile_rows(B, N, itemsize, vmem_budget_bytes=32 * 1024 * 1024):
    """Largest sublane-aligned row tile whose double-buffered working set fits."""
    def tile_bytes(tb):
        # double-buffered (input tile + output tile + boundary row)
        return 2 * (2 * tb * N + N) * itemsize

    cands = [tb for tb in range(8, min(B, 512) + 1, 8)
             if B % tb == 0 and tile_bytes(tb) <= vmem_budget_bytes]
    if cands:
        return max(cands)
    # Fallback: whole batch in one tile (tiny batches, or B not a multiple
    # of 8) -- keeps the (8,128) layout rule satisfied via full-dim blocks.
    return B


def random_mixup(batch, target, *, num_classes, p=0.5, alpha=1.0, key=None,
                 tile_rows=None):
    """JAX/Pallas equivalent of RandomMixup.forward.

    batch:  float (B, C, H, W)   (NCHW, same as the PyTorch module)
    target: int   (B,)           (int32 here; torch uses int64)
    returns (mixed_batch (B,C,H,W), mixed_onehot_target (B, num_classes))
    """
    assert batch.ndim == 4, "Batch ndim should be 4"
    assert target.ndim == 1, "Target ndim should be 1"
    assert num_classes > 0 and alpha > 0

    B, C, H, W = batch.shape
    N = C * H * W

    lam = _sample_lambda(key, p, alpha).reshape(1)      # (1,) f32 -> SMEM

    tb = tile_rows if tile_rows is not None else _choose_tile_rows(
        B, N, jnp.dtype(batch.dtype).itemsize)
    assert B % tb == 0, "tile_rows must divide the batch size"

    x2d = batch.reshape(B, N)        # sublane-dense view for the main tiles
    x3d = batch.reshape(B, 1, N)     # per-row view for the single boundary row
    t2d = target.astype(jnp.int32).reshape(B, 1)

    # --- image blend: grid over row tiles, roll handled via index_map --------
    x_out = pl.pallas_call(
        _mixup_image_kernel,
        grid=(B // tb,),
        in_specs=[
            pl.BlockSpec(memory_space=pltpu.SMEM),                 # lam scalar
            pl.BlockSpec((tb, N), lambda t: (t, 0)),               # current rows
            pl.BlockSpec((1, 1, N),
                         lambda t: ((t * tb + B - 1) % B, 0, 0)),  # rolled boundary row
        ],
        out_specs=pl.BlockSpec((tb, N), lambda t: (t, 0)),
        out_shape=jax.ShapeDtypeStruct((B, N), batch.dtype),
        compiler_params=pltpu.CompilerParams(
            dimension_semantics=("parallel",),        # tiles are independent
            vmem_limit_bytes=48 * 1024 * 1024,        # stays inside v7x's 64 MiB
        ),
    )(lam, x2d, x3d)

    # --- label one-hot + blend: one tiny block, outside the per-image loop ---
    t_out = pl.pallas_call(
        _mixup_label_kernel,
        grid=(1,),
        in_specs=[
            pl.BlockSpec(memory_space=pltpu.SMEM),                 # lam scalar
            pl.BlockSpec((B, 1), lambda i: (0, 0)),                # targets
        ],
        out_specs=pl.BlockSpec((B, num_classes), lambda i: (0, 0)),
        out_shape=jax.ShapeDtypeStruct((B, num_classes), batch.dtype),
        compiler_params=pltpu.CompilerParams(
            dimension_semantics=("arbitrary",)),
    )(lam, t2d)

    return x_out.reshape(B, C, H, W), t_out


# ---------------------------------------------------------------------------
# Demo / self-check
# ---------------------------------------------------------------------------

if __name__ == "__main__":
    key = jax.random.PRNGKey(0)
    k_x, k_t, k_mix = jax.random.split(key, 3)

    B, C, H, W = 2, 4, 16, 16
    num_classes = 10
    p, alpha = 0.5, 1.0

    batch = jax.random.normal(k_x, (B, C, H, W), jnp.float32)
    # torch requires int64 targets; JAX default int32 — semantics identical here.
    target = jax.random.randint(k_t, (B,), 0, num_classes, jnp.int32)

    out_batch, out_target = random_mixup(
        batch, target, num_classes=num_classes, p=p, alpha=alpha, key=k_mix)
    jax.block_until_ready((out_batch, out_target))

    assert out_batch.shape == (B, C, H, W)
    assert out_target.shape == (B, num_classes)

    # Pure-JAX reference with the identical lambda sample.
    lam = _sample_lambda(k_mix, p, alpha)
    oh = jax.nn.one_hot(target, num_classes, dtype=batch.dtype)
    ref_x = lam * batch + (1.0 - lam) * jnp.roll(batch, 1, axis=0)
    ref_t = lam * oh + (1.0 - lam) * jnp.roll(oh, 1, axis=0)
    assert jnp.allclose(out_batch, ref_x, atol=1e-5)
    assert jnp.allclose(out_target, ref_t, atol=1e-5)

    # Multi-tile path: grid > 1, so the roll crosses tile boundaries (and wraps).
    B2 = 16
    batch2 = jax.random.normal(k_x, (B2, C, H, W), jnp.float32)
    target2 = jax.random.randint(k_t, (B2,), 0, num_classes, jnp.int32)
    out_batch2, out_target2 = random_mixup(
        batch2, target2, num_classes=num_classes, p=p, alpha=alpha, key=k_mix,
        tile_rows=8)
    jax.block_until_ready((out_batch2, out_target2))
    oh2 = jax.nn.one_hot(target2, num_classes, dtype=batch2.dtype)
    ref_x2 = lam * batch2 + (1.0 - lam) * jnp.roll(batch2, 1, axis=0)
    ref_t2 = lam * oh2 + (1.0 - lam) * jnp.roll(oh2, 1, axis=0)
    assert jnp.allclose(out_batch2, ref_x2, atol=1e-5)
    assert jnp.allclose(out_target2, ref_t2, atol=1e-5)

    print("KERNEL_OK")
</pallas_src>

<mosaic_0001>
module attributes {stable_mosaic.version = 11 : i64} {
  func.func @_mixup_image_kernel(%arg0: i32, %arg1: memref<1xf32, #tpu.memory_space<smem>>, %arg2: memref<2x1024xf32, #tpu.memory_space<vmem>>, %arg3: memref<1x1x1024xf32, #tpu.memory_space<vmem>>, %arg4: memref<2x1024xf32, #tpu.memory_space<vmem>>) attributes {dimension_semantics = [#tpu.dimension_semantics<parallel>], iteration_bounds = array<i64: 1>, scalar_prefetch = 0 : i64, scratch_operands = 0 : i64, tpu.core_type = #tpu.core_type<tc>, window_params = [{transform_indices = @transform_0, window_bounds = array<i64: 1>}, {transform_indices = @transform_1, window_bounds = array<i64: 2, 1024>}, {transform_indices = @transform_2, window_bounds = array<i64: 1, 1, 1024>}, {transform_indices = @transform_3, window_bounds = array<i64: 2, 1024>}]} {
    %c0 = arith.constant 0 : index
    %0 = memref.load %arg1[%c0] : memref<1xf32, #tpu.memory_space<smem>>
    %cst = arith.constant 1.000000e+00 : f32
    %1 = arith.subf %cst, %0 : f32
    %c0_0 = arith.constant 0 : index
    %c0_1 = arith.constant 0 : index
    %2 = vector.load %arg2[%c0_0, %c0_1] : memref<2x1024xf32, #tpu.memory_space<vmem>>, vector<2x1024xf32>
    %c0_2 = arith.constant 0 : index
    %c0_3 = arith.constant 0 : index
    %c0_4 = arith.constant 0 : index
    %3 = vector.load %arg3[%c0_2, %c0_3, %c0_4] : memref<1x1x1024xf32, #tpu.memory_space<vmem>>, vector<1x1x1024xf32>
    %4 = vector.shape_cast %3 : vector<1x1x1024xf32> to vector<1x1024xf32>
    %5 = vector.extract_strided_slice %2 {offsets = [0, 0], sizes = [1, 1024], strides = [1, 1]} : vector<2x1024xf32> to vector<1x1024xf32>
    %6 = tpu.concatenate %4, %5 in 0 : vector<1x1024xf32>, vector<1x1024xf32> -> vector<2x1024xf32>
    %7 = vector.broadcast %0 : f32 to vector<2x1024xf32>
    %8 = arith.mulf %7, %2 : vector<2x1024xf32>
    %9 = vector.broadcast %1 : f32 to vector<2x1024xf32>
    %10 = arith.mulf %9, %6 : vector<2x1024xf32>
    %11 = arith.addf %8, %10 : vector<2x1024xf32>
    %c0_5 = arith.constant 0 : index
    %c0_6 = arith.constant 0 : index
    %12 = vector.load %arg4[%c0_5, %c0_6] : memref<2x1024xf32, #tpu.memory_space<vmem>>, vector<2x1024xf32>
    tpu.vector_store %arg4[%c0_5, %c0_6], %11 {strides = array<i32>} : memref<2x1024xf32, #tpu.memory_space<vmem>>, vector<2x1024xf32>,
    return
  }
  func.func @transform_0(%arg0: i32) -> i32 {
    %c0_i32 = arith.constant 0 : i32
    %c0_i32_0 = arith.constant 0 : i32
    return %c0_i32 : i32
  }
  func.func @transform_1(%arg0: i32) -> (i32, i32) {
    %c0_i32 = arith.constant 0 : i32
    %c0_i32_0 = arith.constant 0 : i32
    return %arg0, %c0_i32 : i32, i32
  }
  func.func @transform_2(%arg0: i32) -> (i32, i32, i32) {
    %c2_i32 = arith.constant 2 : i32
    %0 = arith.muli %arg0, %c2_i32 : i32
    %c2_i32_0 = arith.constant 2 : i32
    %1 = arith.addi %0, %c2_i32_0 : i32
    %c1_i32 = arith.constant 1 : i32
    %2 = arith.subi %1, %c1_i32 : i32
    %c2_i32_1 = arith.constant 2 : i32
    %c0_i32 = arith.constant 0 : i32
    %3 = arith.cmpi eq, %c2_i32_1, %c0_i32 : i32
    %c1_i32_2 = arith.constant 1 : i32
    %4 = arith.select %3, %c1_i32_2, %c2_i32_1 : i32
    %5 = arith.remsi %2, %4 : i32
    %c0_i32_3 = arith.constant 0 : i32
    %6 = arith.cmpi ne, %5, %c0_i32_3 : i32
    %c0_i32_4 = arith.constant 0 : i32
    %7 = arith.cmpi slt, %5, %c0_i32_4 : i32
    %c0_i32_5 = arith.constant 0 : i32
    %8 = arith.cmpi slt, %4, %c0_i32_5 : i32
    %9 = arith.xori %7, %8 : i1
    %10 = arith.andi %9, %6 : i1
    %11 = arith.addi %5, %4 : i32
    %12 = arith.select %10, %11, %5 : i32
    %c0_i32_6 = arith.constant 0 : i32
    %c0_i32_7 = arith.constant 0 : i32
    %c0_i32_8 = arith.constant 0 : i32
    return %12, %c0_i32_6, %c0_i32_7 : i32, i32, i32
  }
  func.func @transform_3(%arg0: i32) -> (i32, i32) {
    %c0_i32 = arith.constant 0 : i32
    %c0_i32_0 = arith.constant 0 : i32
    return %arg0, %c0_i32 : i32, i32
  }
}

</mosaic_0001>

<llo_original>
// kernel: tpu_custom_call.1
$region0: #{tpu_custom_call.1}
  #allocation0 [shape = 'u32[]', space=smem, size = 0x4, offset = 0x4, fixed_abs, tag = 'smem constant byte address 0x4 - core index']
  #allocation1 [shape = 'u32[144,128]{1,0:T(1,128)}', space=vmem, size = 0x12000, scoped, tag = 'internal scratch']
  #allocation2 [shape = 'f32[1]{0:T(128)S(6)}', space=smem, size = 0x200, scoped, tag = 'scoped memory for tpu_custom_call.1']
  %s0 = inlined_call_operand.<no memory space> [shape: f32[1], index: 0, kind: input, shape index: {}]
  %s1 = inlined_call_operand.hbm [shape: f32[2,1024], index: 1, kind: input, shape index: {}]
  %s2 = inlined_call_operand.hbm [shape: f32[2,1,1024], index: 2, kind: input, shape index: {}]
  %s3 = inlined_call_operand.hbm [shape: f32[2,1024], index: 3, kind: output, shape index: {}]
  %s4 = sld [smem:[#allocation0]]
  $region30: #{tpu_custom_call.1} parent=0
    _
  %s6 = ssub.s32 1, %s4
  %s7 = scalar_select 0, %s6, %s4
  %8 = sst [smem:[#allocation2]] %s0
  $region1: #{tpu_custom_call.1} parent=0
    #allocation3 [shape = 'u8[8192]{0}', space=vmem, size = 0x2000, scoped, tag = 'input window, operand 1, single buffered']
    #allocation4 [shape = 's32[1]{0}', space=sflag, size = 0x4, scoped, tag = 'scoped memory for tpu_custom_call.1']
    #allocation5 [shape = 's32[1]{0}', space=sflag, size = 0x4, scoped, tag = 'scoped memory for tpu_custom_call.1']
    #allocation6 [shape = 'u8[4096]{0}', space=vmem, size = 0x1000, scoped, tag = 'input window, operand 2, single buffered']
    #allocation7 [shape = 's32[1]{0}', space=sflag, size = 0x4, scoped, tag = 'scoped memory for tpu_custom_call.1']
    #allocation8 [shape = 'u8[8192]{0}', space=vmem, size = 0x2000, scoped, tag = 'output window, operand 0, single buffered']
    %9 = vsyncpa [#allocation4], 0
    %10 = vsyncpa [#allocation7], 0
    %11 = vsyncpa [#allocation5], 0
    // Predicated region
    $region2: #{tpu_custom_call.1} parent=1 // pred_check
      _
    $region3: #{tpu_custom_call.1} parent=1 // pred_check_branch
      %13 = sbr.rel (0) target = $region5
    $region4: #{tpu_custom_call.1} parent=1 // pred_region
      _
    $region5: #{tpu_custom_call.1} parent=1 // pred_fallthru
      _
    // Predicated region
    $region6: #{tpu_custom_call.1} parent=1 // pred_check
      _
    $region7: #{tpu_custom_call.1} parent=1 // pred_check_branch
      %15 = sbr.rel (0) target = $region9
    $region8: #{tpu_custom_call.1} parent=1 // pred_region
      %s17 = ssub.s32 256, 256
      %18 = vsyncadd [#allocation4], %s17
      %s20 = sshll.u32 [#allocation3], 4
      %s21 = int_to_ptr.vmem [resolvable:$true] %s20
      %23 = dma.hbm_to_vmem [thread:$0]  %s1, 256, %s21, [#allocation4]
    $region9: #{tpu_custom_call.1} parent=1 // pred_fallthru
      _
    // Predicated region
    $region10: #{tpu_custom_call.1} parent=1 // pred_check
      _
    $region11: #{tpu_custom_call.1} parent=1 // pred_check_branch
      %25 = sbr.rel (0) target = $region13
    $region12: #{tpu_custom_call.1} parent=1 // pred_region
      %s26 = smul.u32 0, 2
      %s27 = sadd.s32 %s26, 1
      %p28 = scmp.lt.s32.totalorder %s27, 0
      %s29 = ssub.s32 0, %s27
      %s30 = scalar_select %p28, %s29, %s27
      %s31 = sand.u32 %s30, 1
      %s32 = ssub.s32 0, %s31
      %s33 = scalar_select %p28, %s32, %s31
      %p34 = scmp.ne.s32.totalorder %s33, 0
      %p35 = scmp.lt.s32.totalorder %s33, 0
      %p36 = pnand %p35, %p34
      %p37 = pneg %p36
      %s38 = sadd.s32 %s33, 2
      %s39 = scalar_select %p37, %s38, %s33
      %s41 = ssub.s32 128, 128
      %42 = vsyncadd [#allocation7], %s41
      %s43 = smul.addr %s39, 8
      %s44 = smul.addr %s43, 16
      %s45 = scalar_lea.hbm %s2, %s44
      %s47 = sshll.u32 [#allocation6], 4
      %s48 = int_to_ptr.vmem [resolvable:$true] %s47
      %50 = dma.hbm_to_vmem [thread:$0]  %s45, 128, %s48, [#allocation7]
    $region13: #{tpu_custom_call.1} parent=1 // pred_fallthru
      _
    // Predicated region
    $region14: #{tpu_custom_call.1} parent=1 // pred_check
      _
    $region15: #{tpu_custom_call.1} parent=1 // pred_check_branch
      %52 = sbr.rel (0) target = $region17
    $region16: #{tpu_custom_call.1} parent=1 // pred_region
      %53 = dma.done [#allocation4], 256
    $region17: #{tpu_custom_call.1} parent=1 // pred_fallthru
      _
    // Predicated region
    $region18: #{tpu_custom_call.1} parent=1 // pred_check
      _
    $region19: #{tpu_custom_call.1} parent=1 // pred_check_branch
      %55 = sbr.rel (0) target = $region21
    $region20: #{tpu_custom_call.1} parent=1 // pred_region
      %56 = dma.done [#allocation7], 128
    $region21: #{tpu_custom_call.1} parent=1 // pred_fallthru
      _
    %s57 = smul.u32 0, 2
    %s58 = sadd.s32 %s57, 1
    %p59 = scmp.lt.s32.totalorder %s58, 0
    %s60 = ssub.s32 0, %s58
    %s61 = scalar_select %p59, %s60, %s58
    %s62 = sand.u32 %s61, 1
    %s63 = ssub.s32 0, %s62
    %s64 = scalar_select %p59, %s63, %s62
    %p65 = scmp.ne.s32.totalorder %s64, 0
    %p66 = scmp.lt.s32.totalorder %s64, 0
    %p67 = pnand %p66, %p65
    %p68 = pneg %p67
    %s69 = sadd.s32 %s64, 2
    %s70 = scalar_select %p68, %s69, %s64
    %s71 = sld [smem:[#allocation2]]
    %s72 = ssub.f32 1.0, %s71
    %v73 = vld [vmem:[#allocation3] sm:$0xff]
    %v74 = vld [vmem:[#allocation3 + $0x8] sm:$0xff]
    %v75 = vld [vmem:[#allocation6] sm:$0xff]
    %v77 = vlaneseq
    %v78 = vshrl.u32 %v77, 7
    %v79 = vsub.s32 0, %v78
    %v80 = vrot.slane %v75, %v79
    %v81 = vlaneseq
    %v82 = vshrl.u32 %v81, 7
    %v83 = vsub.s32 1, %v82
    %v84 = vrot.slane %v75, %v83
    %v85 = vlaneseq
    %v86 = vshrl.u32 %v85, 7
    %v87 = vsub.s32 2, %v86
    %v88 = vrot.slane %v75, %v87
    %v89 = vlaneseq
    %v90 = vshrl.u32 %v89, 7
    %v91 = vsub.s32 3, %v90
    %v92 = vrot.slane %v75, %v91
    %v93 = vlaneseq
    %v94 = vshrl.u32 %v93, 7
    %v95 = vsub.s32 4, %v94
    %v96 = vrot.slane %v75, %v95
    %v97 = vlaneseq
    %v98 = vshrl.u32 %v97, 7
    %v99 = vsub.s32 5, %v98
    %v100 = vrot.slane %v75, %v99
    %v101 = vlaneseq
    %v102 = vshrl.u32 %v101, 7
    %v103 = vsub.s32 6, %v102
    %v104 = vrot.slane %v75, %v103
    %v105 = vlaneseq
    %v106 = vshrl.u32 %v105, 7
    %v107 = vsub.s32 7, %v106
    %v108 = vrot.slane %v75, %v107
    %v119 = vlaneseq
    %v120 = vshrl.u32 %v119, 7
    %v121 = vsub.s32 0, %v120
    %v122 = vrot.slane %v73, %v121
    %v123 = vlaneseq
    %v124 = vshrl.u32 %v123, 7
    %v125 = vsub.s32 2, %v124
    %v126 = vrot.slane %v73, %v125
    %v127 = vlaneseq
    %v128 = vshrl.u32 %v127, 7
    %v129 = vsub.s32 4, %v128
    %v130 = vrot.slane %v73, %v129
    %v131 = vlaneseq
    %v132 = vshrl.u32 %v131, 7
    %v133 = vsub.s32 6, %v132
    %v134 = vrot.slane %v73, %v133
    %v135 = vlaneseq
    %v136 = vshrl.u32 %v135, 7
    %v137 = vsub.s32 0, %v136
    %v138 = vrot.slane %v74, %v137
    %v139 = vlaneseq
    %v140 = vshrl.u32 %v139, 7
    %v141 = vsub.s32 2, %v140
    %v142 = vrot.slane %v74, %v141
    %v143 = vlaneseq
    %v144 = vshrl.u32 %v143, 7
    %v145 = vsub.s32 4, %v144
    %v146 = vrot.slane %v74, %v145
    %v147 = vlaneseq
    %v148 = vshrl.u32 %v147, 7
    %v149 = vsub.s32 6, %v148
    %v150 = vrot.slane %v74, %v149
    %vm159 = vcmask 1040384
    %v160 = vsel %vm159, %v80, %v122
    %v161 = vsel %vm159, %v84, %v126
    %v162 = vsel %vm159, %v88, %v130
    %v163 = vsel %vm159, %v92, %v134
    %v164 = vsel %vm159, %v96, %v138
    %v165 = vsel %vm159, %v100, %v142
    %v166 = vsel %vm159, %v104, %v146
    %v167 = vsel %vm159, %v108, %v150
    %v168 = vstv %s71
    %v169 = vmul.f32 %v168, %v73
    %v170 = vmul.f32 %v168, %v74
    %v171 = vstv %s72
    %v172 = vmul.f32 %v171, %v160
    %v173 = vmul.f32 %v171, %v161
    %v174 = vmul.f32 %v171, %v162
    %v175 = vmul.f32 %v171, %v163
    %v176 = vmul.f32 %v171, %v164
    %v177 = vmul.f32 %v171, %v165
    %v178 = vmul.f32 %v171, %v166
    %v179 = vmul.f32 %v171, %v167
    %v188 = vcombine.low %v172, %v173
    %v189 = vcombine.low %v174, %v175
    %v191 = vunpack.c.l.s4 1983009808
    %v192 = vunpack.c.0.s8 %v191
    %v193 = vlaneseq
    %v194 = vshrl.u32 %v193, 7
    %v195 = vsub.s32 %v192, %v194
    %v196 = vrot.slane %v188, %v195
    %v198 = vunpack.c.l.s4 1983009808
    %v199 = vunpack.c.0.s8 %v198
    %v200 = vlaneseq
    %v201 = vshrl.u32 %v200, 7
    %v202 = vsub.s32 %v199, %v201
    %v203 = vrot.slane %v189, %v202
    %v204 = vcombine.low %v196, %v203
    %v205 = vcombine.low %v176, %v177
    %v206 = vcombine.low %v178, %v179
    %v208 = vunpack.c.l.s4 1983009808
    %v209 = vunpack.c.0.s8 %v208
    %v210 = vlaneseq
    %v211 = vshrl.u32 %v210, 7
    %v212 = vsub.s32 %v209, %v211
    %v213 = vrot.slane %v205, %v212
    %v215 = vunpack.c.l.s4 1983009808
    %v216 = vunpack.c.0.s8 %v215
    %v217 = vlaneseq
    %v218 = vshrl.u32 %v217, 7
    %v219 = vsub.s32 %v216, %v218
    %v220 = vrot.slane %v206, %v219
    %v221 = vcombine.low %v213, %v220
    %v224 = vadd.f32 %v169, %v204
    %v225 = vadd.f32 %v170, %v221
    %226 = vst [vmem:[#allocation8] sm:$0xff] %v224
    %227 = vst [vmem:[#allocation8 + $0x8] sm:$0xff] %v225
    // Predicated region
    $region22: #{tpu_custom_call.1} parent=1 // pred_check
      _
    $region23: #{tpu_custom_call.1} parent=1 // pred_check_branch
      %229 = sbr.rel (0) target = $region25
    $region24: #{tpu_custom_call.1} parent=1 // pred_region
      %s231 = ssub.s32 256, 256
      %232 = vsyncadd [#allocation5], %s231
      %s234 = sshll.u32 [#allocation8], 4
      %s235 = int_to_ptr.vmem [resolvable:$true] %s234
      %237 = dma.vmem_to_hbm [thread:$0]  %s235, 256, %s3, [#allocation5]
    $region25: #{tpu_custom_call.1} parent=1 // pred_fallthru
      _
    // Predicated region
    $region26: #{tpu_custom_call.1} parent=1 // pred_check
      _
    $region27: #{tpu_custom_call.1} parent=1 // pred_check_branch
      %239 = sbr.rel (0) target = $region29
    $region28: #{tpu_custom_call.1} parent=1 // pred_region
      %240 = dma.done [#allocation5], 256
    $region29: #{tpu_custom_call.1} parent=1 // pred_fallthru
      _
    %241 = vsyncpa [#allocation4], 1
    %242 = vsyncpa [#allocation7], 1
    %243 = vsyncpa [#allocation5], 1

</llo_original>
